<compile_context>
chip_gen: v5e
topology: v5e:2x2
jax: 0.10.0
libtpu: 0.0.40
codegen_flags: <defaults>
</compile_context>

<pallas_src>
import jax
import jax.numpy as jnp
from jax.experimental import pallas as pl
from jax.experimental.pallas import tpu as pltpu

LATENT = 100
LATENT_PAD = 128          # pad K of layer 1 to a full lane tile
H1, H2 = 128, 256
OUT = 28 * 28             # 784 (== full array dim in the output BlockSpec)


def _round_up(x, m):
    return ((x + m - 1) // m) * m


def _generator_kernel(x_ref, w1_ref, b1_ref, w2_ref, b2_ref, w3_ref, b3_ref,
                      o_ref):
    # Layer 1: Linear(128pad -> 128) + ReLU   (bf16 MXU inputs, f32 accumulate)
    h1 = jnp.dot(x_ref[...], w1_ref[...], preferred_element_type=jnp.float32)
    h1 = jnp.maximum(h1 + b1_ref[...], 0.0)

    # Layer 2: Linear(128 -> 256) + ReLU
    h2 = jnp.dot(h1.astype(jnp.bfloat16), w2_ref[...],
                 preferred_element_type=jnp.float32)
    h2 = jnp.maximum(h2 + b2_ref[...], 0.0)

    # Layer 3: Linear(256 -> 784) + Sigmoid
    h3 = jnp.dot(h2.astype(jnp.bfloat16), w3_ref[...],
                 preferred_element_type=jnp.float32)
    h3 = h3 + b3_ref[...]
    # sigmoid(x) = 0.5 * (tanh(x/2) + 1): one EUP transcendental, no VPU divide
    o_ref[...] = (0.5 * (jnp.tanh(0.5 * h3) + 1.0)).astype(o_ref.dtype)


def prepare_generator_params(params):
    """One-time parameter prep: pad layer-1 K to 128, cast weights to bf16.

    Do this once (outside the training/inference step) so the pads/casts are
    not re-executed on every forward call."""
    w1, b1, w2, b2, w3, b3 = params
    w1p = jnp.pad(w1, ((0, LATENT_PAD - LATENT), (0, 0))).astype(jnp.bfloat16)
    w2p = w2.astype(jnp.bfloat16)
    w3p = w3.astype(jnp.bfloat16)
    b1p = b1.astype(jnp.float32)
    b2p = b2.astype(jnp.float32)
    b3p = b3.astype(jnp.float32)
    return (w1p, b1p, w2p, b2p, w3p, b3p)


def generator_forward(x, prepared_params, *, tm=512):
    """x: (B, 100) float32 -> (B, 784) bfloat16."""
    w1p, b1p, w2p, b2p, w3p, b3p = prepared_params
    B, K = x.shape
    assert K == LATENT

    # Batch tiling: sublane-aligned tile height, capped at ceil(B/2) so the
    # grid has >= 2 parallel steps whenever possible (lets v7x use both TCs).
    half = _round_up(-(-B // 2), 8)
    tm_eff = max(8, min(tm, half))
    b_pad = _round_up(B, tm_eff)
    grid = (b_pad // tm_eff,)

    # Activation input: cast to bf16 + pad 100->128 in the wrapper (halves the
    # per-step input DMA; no in-kernel cast needed).
    xp = jnp.pad(x.astype(jnp.bfloat16),
                 ((0, b_pad - B), (0, LATENT_PAD - K)))

    const = lambda i: (0, 0)                   # weights/biases stay resident
    out = pl.pallas_call(
        _generator_kernel,
        out_shape=jax.ShapeDtypeStruct((b_pad, OUT), jnp.bfloat16),
        grid=grid,
        in_specs=[
            pl.BlockSpec((tm_eff, LATENT_PAD), lambda i: (i, 0)),   # x tile
            pl.BlockSpec((LATENT_PAD, H1), const),                  # w1
            pl.BlockSpec((1, H1), const),                           # b1
            pl.BlockSpec((H1, H2), const),                          # w2
            pl.BlockSpec((1, H2), const),                           # b2
            pl.BlockSpec((H2, OUT), const),                         # w3
            pl.BlockSpec((1, OUT), const),                          # b3
        ],
        out_specs=pl.BlockSpec((tm_eff, OUT), lambda i: (i, 0)),
        compiler_params=pltpu.CompilerParams(
            dimension_semantics=("parallel",)),
    )(xp, w1p, b1p, w2p, b2p, w3p, b3p)

    # Only row padding (if any) needs to be dropped; no column slice.
    if b_pad != B:
        out = out[:B]
    return out


def init_generator_params(key):
    """PyTorch-style uniform(+-1/sqrt(fan_in)) init.

    Weights stored as (in_features, out_features); biases as (1, out)."""
    dims = [(LATENT, H1), (H1, H2), (H2, OUT)]
    params = []
    for (fan_in, fan_out) in dims:
        key, kw, kb = jax.random.split(key, 3)
        bound = 1.0 / (fan_in ** 0.5)
        w = jax.random.uniform(kw, (fan_in, fan_out), jnp.float32,
                               minval=-bound, maxval=bound)
        b = jax.random.uniform(kb, (1, fan_out), jnp.float32,
                               minval=-bound, maxval=bound)
        params += [w, b]
    return tuple(params)


def generator_reference(x, params):
    """Plain-JAX f32 reference of the same forward pass."""
    w1, b1, w2, b2, w3, b3 = params
    h = jnp.maximum(x @ w1 + b1, 0.0)
    h = jnp.maximum(h @ w2 + b2, 0.0)
    return jax.nn.sigmoid(h @ w3 + b3)


if __name__ == "__main__":
    key = jax.random.PRNGKey(0)
    k_params, k_x1, k_x2 = jax.random.split(key, 3)
    params = init_generator_params(k_params)
    prepared = prepare_generator_params(params)   # one-time prep

    # Small batch (single grid step).
    x1 = jax.random.normal(k_x1, (8, LATENT), dtype=jnp.float32)
    out1 = jax.block_until_ready(generator_forward(x1, prepared))
    ref1 = generator_reference(x1, params)
    assert out1.shape == (8, OUT)
    assert out1.dtype == jnp.bfloat16
    # bf16 weights + bf16 output store vs f32 reference -> loosened tolerance.
    assert jnp.allclose(out1.astype(jnp.float32), ref1, atol=3e-2, rtol=0.0), \
        float(jnp.max(jnp.abs(out1.astype(jnp.float32) - ref1)))

    # Non-multiple batch with a multi-step grid (exercises tiling + padding).
    x2 = jax.random.normal(k_x2, (40, LATENT), dtype=jnp.float32)
    out2 = jax.block_until_ready(generator_forward(x2, prepared, tm=16))
    ref2 = generator_reference(x2, params)
    assert out2.shape == (40, OUT)
    assert jnp.allclose(out2.astype(jnp.float32), ref2, atol=3e-2, rtol=0.0), \
        float(jnp.max(jnp.abs(out2.astype(jnp.float32) - ref2)))

    print("KERNEL_OK")
</pallas_src>

<mosaic_0001>
module attributes {stable_mosaic.version = 11 : i64} {
  func.func @_generator_kernel(%arg0: i32, %arg1: memref<8x128xbf16, #tpu.memory_space<vmem>>, %arg2: memref<128x128xbf16, #tpu.memory_space<vmem>>, %arg3: memref<1x128xf32, #tpu.memory_space<vmem>>, %arg4: memref<128x256xbf16, #tpu.memory_space<vmem>>, %arg5: memref<1x256xf32, #tpu.memory_space<vmem>>, %arg6: memref<256x784xbf16, #tpu.memory_space<vmem>>, %arg7: memref<1x784xf32, #tpu.memory_space<vmem>>, %arg8: memref<8x784xbf16, #tpu.memory_space<vmem>>) attributes {dimension_semantics = [#tpu.dimension_semantics<parallel>], iteration_bounds = array<i64: 1>, scalar_prefetch = 0 : i64, scratch_operands = 0 : i64, tpu.core_type = #tpu.core_type<tc>, window_params = [{transform_indices = @transform_0, window_bounds = array<i64: 8, 128>}, {pipeline_mode = #tpu.pipeline_mode<synchronous>, transform_indices = @transform_1, window_bounds = array<i64: 128, 128>}, {pipeline_mode = #tpu.pipeline_mode<synchronous>, transform_indices = @transform_2, window_bounds = array<i64: 1, 128>}, {pipeline_mode = #tpu.pipeline_mode<synchronous>, transform_indices = @transform_3, window_bounds = array<i64: 128, 256>}, {pipeline_mode = #tpu.pipeline_mode<synchronous>, transform_indices = @transform_4, window_bounds = array<i64: 1, 256>}, {pipeline_mode = #tpu.pipeline_mode<synchronous>, transform_indices = @transform_5, window_bounds = array<i64: 256, 784>}, {pipeline_mode = #tpu.pipeline_mode<synchronous>, transform_indices = @transform_6, window_bounds = array<i64: 1, 784>}, {transform_indices = @transform_7, window_bounds = array<i64: 8, 784>}]} {
    %c0 = arith.constant 0 : index
    %c0_0 = arith.constant 0 : index
    %0 = vector.load %arg1[%c0, %c0_0] : memref<8x128xbf16, #tpu.memory_space<vmem>>, vector<8x128xbf16>
    %c0_1 = arith.constant 0 : index
    %c0_2 = arith.constant 0 : index
    %1 = vector.load %arg2[%c0_1, %c0_2] : memref<128x128xbf16, #tpu.memory_space<vmem>>, vector<128x128xbf16>
    %cst = arith.constant dense<0.000000e+00> : vector<8x128xf32>
    %2 = tpu.matmul %0, %1, %cst {dimension_numbers = #tpu.dot_dimension_numbers<[1], [0], [0], [1], [0, 0, 1, 1], [], []>} : vector<8x128xbf16>, vector<128x128xbf16>, vector<8x128xf32> -> vector<8x128xf32>
    %c0_3 = arith.constant 0 : index
    %c0_4 = arith.constant 0 : index
    %3 = vector.load %arg3[%c0_3, %c0_4] : memref<1x128xf32, #tpu.memory_space<vmem>>, vector<1x128xf32>
    %4 = vector.broadcast %3 : vector<1x128xf32> to vector<8x128xf32>
    %5 = arith.addf %2, %4 : vector<8x128xf32>
    %cst_5 = arith.constant 0.000000e+00 : f32
    %6 = vector.broadcast %cst_5 : f32 to vector<8x128xf32>
    %7 = arith.maximumf %5, %6 : vector<8x128xf32>
    %8 = arith.truncf %7 : vector<8x128xf32> to vector<8x128xbf16>
    %c0_6 = arith.constant 0 : index
    %c0_7 = arith.constant 0 : index
    %9 = vector.load %arg4[%c0_6, %c0_7] : memref<128x256xbf16, #tpu.memory_space<vmem>>, vector<128x256xbf16>
    %cst_8 = arith.constant dense<0.000000e+00> : vector<8x256xf32>
    %10 = tpu.matmul %8, %9, %cst_8 {dimension_numbers = #tpu.dot_dimension_numbers<[1], [0], [0], [1], [0, 0, 1, 1], [], []>} : vector<8x128xbf16>, vector<128x256xbf16>, vector<8x256xf32> -> vector<8x256xf32>
    %c0_9 = arith.constant 0 : index
    %c0_10 = arith.constant 0 : index
    %11 = vector.load %arg5[%c0_9, %c0_10] : memref<1x256xf32, #tpu.memory_space<vmem>>, vector<1x256xf32>
    %12 = vector.broadcast %11 : vector<1x256xf32> to vector<8x256xf32>
    %13 = arith.addf %10, %12 : vector<8x256xf32>
    %cst_11 = arith.constant 0.000000e+00 : f32
    %14 = vector.broadcast %cst_11 : f32 to vector<8x256xf32>
    %15 = arith.maximumf %13, %14 : vector<8x256xf32>
    %16 = arith.truncf %15 : vector<8x256xf32> to vector<8x256xbf16>
    %c0_12 = arith.constant 0 : index
    %c0_13 = arith.constant 0 : index
    %17 = vector.load %arg6[%c0_12, %c0_13] : memref<256x784xbf16, #tpu.memory_space<vmem>>, vector<256x784xbf16>
    %cst_14 = arith.constant dense<0.000000e+00> : vector<8x784xf32>
    %18 = tpu.matmul %16, %17, %cst_14 {dimension_numbers = #tpu.dot_dimension_numbers<[1], [0], [0], [1], [0, 0, 1, 1], [], []>} : vector<8x256xbf16>, vector<256x784xbf16>, vector<8x784xf32> -> vector<8x784xf32>
    %c0_15 = arith.constant 0 : index
    %c0_16 = arith.constant 0 : index
    %19 = vector.load %arg7[%c0_15, %c0_16] : memref<1x784xf32, #tpu.memory_space<vmem>>, vector<1x784xf32>
    %20 = vector.broadcast %19 : vector<1x784xf32> to vector<8x784xf32>
    %21 = arith.addf %18, %20 : vector<8x784xf32>
    %cst_17 = arith.constant 5.000000e-01 : f32
    %22 = vector.broadcast %cst_17 : f32 to vector<8x784xf32>
    %23 = arith.mulf %22, %21 : vector<8x784xf32>
    %24 = math.tanh %23 : vector<8x784xf32>
    %cst_18 = arith.constant 1.000000e+00 : f32
    %25 = vector.broadcast %cst_18 : f32 to vector<8x784xf32>
    %26 = arith.addf %24, %25 : vector<8x784xf32>
    %cst_19 = arith.constant 5.000000e-01 : f32
    %27 = vector.broadcast %cst_19 : f32 to vector<8x784xf32>
    %28 = arith.mulf %27, %26 : vector<8x784xf32>
    %29 = arith.truncf %28 : vector<8x784xf32> to vector<8x784xbf16>
    %c0_20 = arith.constant 0 : index
    %c0_21 = arith.constant 0 : index
    %30 = vector.load %arg8[%c0_20, %c0_21] : memref<8x784xbf16, #tpu.memory_space<vmem>>, vector<8x784xbf16>
    tpu.vector_store %arg8[%c0_20, %c0_21], %29 {strides = array<i32>} : memref<8x784xbf16, #tpu.memory_space<vmem>>, vector<8x784xbf16>,
    return
  }
  func.func @transform_0(%arg0: i32) -> (i32, i32) {
    %c0_i32 = arith.constant 0 : i32
    %c0_i32_0 = arith.constant 0 : i32
    return %arg0, %c0_i32 : i32, i32
  }
  func.func @transform_1(%arg0: i32) -> (i32, i32) {
    %c0_i32 = arith.constant 0 : i32
    %c0_i32_0 = arith.constant 0 : i32
    %c0_i32_1 = arith.constant 0 : i32
    return %c0_i32, %c0_i32_0 : i32, i32
  }
  func.func @transform_2(%arg0: i32) -> (i32, i32) {
    %c0_i32 = arith.constant 0 : i32
    %c0_i32_0 = arith.constant 0 : i32
    %c0_i32_1 = arith.constant 0 : i32
    return %c0_i32, %c0_i32_0 : i32, i32
  }
  func.func @transform_3(%arg0: i32) -> (i32, i32) {
    %c0_i32 = arith.constant 0 : i32
    %c0_i32_0 = arith.constant 0 : i32
    %c0_i32_1 = arith.constant 0 : i32
    return %c0_i32, %c0_i32_0 : i32, i32
  }
  func.func @transform_4(%arg0: i32) -> (i32, i32) {
    %c0_i32 = arith.constant 0 : i32
    %c0_i32_0 = arith.constant 0 : i32
    %c0_i32_1 = arith.constant 0 : i32
    return %c0_i32, %c0_i32_0 : i32, i32
  }
  func.func @transform_5(%arg0: i32) -> (i32, i32) {
    %c0_i32 = arith.constant 0 : i32
    %c0_i32_0 = arith.constant 0 : i32
    %c0_i32_1 = arith.constant 0 : i32
    return %c0_i32, %c0_i32_0 : i32, i32
  }
  func.func @transform_6(%arg0: i32) -> (i32, i32) {
    %c0_i32 = arith.constant 0 : i32
    %c0_i32_0 = arith.constant 0 : i32
    %c0_i32_1 = arith.constant 0 : i32
    return %c0_i32, %c0_i32_0 : i32, i32
  }
  func.func @transform_7(%arg0: i32) -> (i32, i32) {
    %c0_i32 = arith.constant 0 : i32
    %c0_i32_0 = arith.constant 0 : i32
    return %arg0, %c0_i32 : i32, i32
  }
}

</mosaic_0001>

<llo_original>
// kernel: tpu_custom_call.1
$region0: #{tpu_custom_call.1}
  #allocation0 [shape = 'u32[]', space=smem, size = 0x4, offset = 0x4, fixed_abs, tag = 'smem constant byte address 0x4 - core index']
  #allocation1 [shape = 'u32[72,128]{1,0:T(1,128)}', space=vmem, size = 0x9000, scoped, tag = 'internal scratch']
  %s0 = inlined_call_operand.vmem [shape: bf16[8,128], index: 0, kind: input, shape index: {}]
  %s1 = inlined_call_operand.vmem [shape: bf16[128,128], index: 1, kind: input, shape index: {}]
  %s2 = inlined_call_operand.vmem [shape: f32[1,128], index: 2, kind: input, shape index: {}]
  %s3 = inlined_call_operand.vmem [shape: bf16[128,256], index: 3, kind: input, shape index: {}]
  %s4 = inlined_call_operand.vmem [shape: f32[1,256], index: 4, kind: input, shape index: {}]
  %s5 = inlined_call_operand.vmem [shape: bf16[256,784], index: 5, kind: input, shape index: {}]
  %s6 = inlined_call_operand.vmem [shape: f32[1,784], index: 6, kind: input, shape index: {}]
  %s7 = inlined_call_operand.hbm [shape: bf16[8,784], index: 7, kind: output, shape index: {}]
  %s8 = sld [smem:[#allocation0]]
  $region38: #{tpu_custom_call.1} parent=0
    _
  %s10 = ssub.s32 1, %s8
  %s11 = scalar_select 0, %s10, %s8
  $region1: #{tpu_custom_call.1} parent=0
    #allocation2 [shape = 'u8[14336]{0}', space=vmem, size = 0x3800, scoped, tag = 'output window, operand 0, single buffered']
    #allocation3 [shape = 's32[1]{0}', space=sflag, size = 0x4, scoped, tag = 'scoped memory for tpu_custom_call.1']
    %12 = vsyncpa [#allocation3], 0
    // Predicated region
    $region2: #{tpu_custom_call.1} parent=1 // pred_check
      _
    $region3: #{tpu_custom_call.1} parent=1 // pred_check_branch
      %14 = sbr.rel (0) target = $region5
    $region4: #{tpu_custom_call.1} parent=1 // pred_region
      _
    $region5: #{tpu_custom_call.1} parent=1 // pred_fallthru
      _
    // Predicated region
    $region6: #{tpu_custom_call.1} parent=1 // pred_check
      _
    $region7: #{tpu_custom_call.1} parent=1 // pred_check_branch
      %16 = sbr.rel (0) target = $region9
    $region8: #{tpu_custom_call.1} parent=1 // pred_region
      _
    $region9: #{tpu_custom_call.1} parent=1 // pred_fallthru
      _
    // Predicated region
    $region10: #{tpu_custom_call.1} parent=1 // pred_check
      _
    $region11: #{tpu_custom_call.1} parent=1 // pred_check_branch
      %18 = sbr.rel (0) target = $region13
    $region12: #{tpu_custom_call.1} parent=1 // pred_region
      _
    $region13: #{tpu_custom_call.1} parent=1 // pred_fallthru
      _
    // Predicated region
    $region14: #{tpu_custom_call.1} parent=1 // pred_check
      _
    $region15: #{tpu_custom_call.1} parent=1 // pred_check_branch
      %20 = sbr.rel (0) target = $region17
    $region16: #{tpu_custom_call.1} parent=1 // pred_region
      _
    $region17: #{tpu_custom_call.1} parent=1 // pred_fallthru
      _
    // Predicated region
    $region18: #{tpu_custom_call.1} parent=1 // pred_check
      _
    $region19: #{tpu_custom_call.1} parent=1 // pred_check_branch
      %22 = sbr.rel (0) target = $region21
    $region20: #{tpu_custom_call.1} parent=1 // pred_region
      _
    $region21: #{tpu_custom_call.1} parent=1 // pred_fallthru
      _
    // Predicated region
    $region22: #{tpu_custom_call.1} parent=1 // pred_check
      _
    $region23: #{tpu_custom_call.1} parent=1 // pred_check_branch
      %24 = sbr.rel (0) target = $region25
    $region24: #{tpu_custom_call.1} parent=1 // pred_region
      _
    $region25: #{tpu_custom_call.1} parent=1 // pred_fallthru
      _
    // Predicated region
    $region26: #{tpu_custom_call.1} parent=1 // pred_check
      _
    $region27: #{tpu_custom_call.1} parent=1 // pred_check_branch
      %26 = sbr.rel (0) target = $region29
    $region28: #{tpu_custom_call.1} parent=1 // pred_region
      _
    $region29: #{tpu_custom_call.1} parent=1 // pred_fallthru
      _
    %v27 = vld [vmem:[%s0] sm:$0xf]
    %v28 = vld [vmem:[%s1] sm:$0xf]
    %v29 = vld [vmem:[%s1 + $0x4] sm:$0xf]
    %v30 = vld [vmem:[%s1 + $0x8] sm:$0xf]
    %v31 = vld [vmem:[%s1 + $0xc] sm:$0xf]
    %v32 = vld [vmem:[%s1 + $0x10] sm:$0xf]
    %v33 = vld [vmem:[%s1 + $0x14] sm:$0xf]
    %v34 = vld [vmem:[%s1 + $0x18] sm:$0xf]
    %v35 = vld [vmem:[%s1 + $0x1c] sm:$0xf]
    %v36 = vld [vmem:[%s1 + $0x20] sm:$0xf]
    %v37 = vld [vmem:[%s1 + $0x24] sm:$0xf]
    %v38 = vld [vmem:[%s1 + $0x28] sm:$0xf]
    %v39 = vld [vmem:[%s1 + $0x2c] sm:$0xf]
    %v40 = vld [vmem:[%s1 + $0x30] sm:$0xf]
    %v41 = vld [vmem:[%s1 + $0x34] sm:$0xf]
    %v42 = vld [vmem:[%s1 + $0x38] sm:$0xf]
    %v43 = vld [vmem:[%s1 + $0x3c] sm:$0xf]
    %v44 = vld [vmem:[%s2] sm:$0x1]
    %v46 = vperm.slane %v44, 0
    %v64 = vunpack.c.l.b16 %v28
    %v65 = vunpack.c.l.b16 %v29
    %v66 = vunpack.c.l.b16 %v30
    %v67 = vunpack.c.l.b16 %v31
    %v68 = vunpack.c.l.b16 %v32
    %v69 = vunpack.c.l.b16 %v33
    %v70 = vunpack.c.l.b16 %v34
    %v71 = vunpack.c.l.b16 %v35
    %v72 = vunpack.c.l.b16 %v36
    %v73 = vunpack.c.l.b16 %v37
    %v74 = vunpack.c.l.b16 %v38
    %v75 = vunpack.c.l.b16 %v39
    %v76 = vunpack.c.l.b16 %v40
    %v77 = vunpack.c.l.b16 %v41
    %v78 = vunpack.c.l.b16 %v42
    %v79 = vunpack.c.l.b16 %v43
    %v80 = vpack.c.b16 %v65, %v64
    %v81 = vpack.c.b16 %v67, %v66
    %v82 = vpack.c.b16 %v69, %v68
    %v83 = vpack.c.b16 %v71, %v70
    %v84 = vpack.c.b16 %v73, %v72
    %v85 = vpack.c.b16 %v75, %v74
    %v86 = vpack.c.b16 %v77, %v76
    %v87 = vpack.c.b16 %v79, %v78
    %96 = vmatpush.bf16.msra.mxu0 %v87
    %97 = vmatpush.bf16.msra.mxu0 %v86
    %98 = vmatpush.bf16.msra.mxu0 %v85
    %99 = vmatpush.bf16.msra.mxu0 %v84
    %100 = vmatpush.bf16.msra.mxu0 %v83
    %101 = vmatpush.bf16.msra.mxu0 %v82
    %102 = vmatpush.bf16.msra.mxu0 %v81
    %103 = vmatpush.bf16.msra.mxu0 %v80
    %104 = vmatmul.bf16.gmra.mxu0 %v27
    %v105 = vpop.f32.mrf.mxu0
    %v106 = vadd.f32 %v46, %v105
    %v107 = vpop.f32.mrf.mxu0
    %108 = vdwg.mxu0
    %v109 = vmax.f32 %v106, 0.0
    %v110 = vpack.c.bf16 %v109, %v109
    %v111 = vld [vmem:[%s3] sm:$0xff]
    %v112 = vld [vmem:[%s3 + $0x8] sm:$0xff]
    %v113 = vld [vmem:[%s3 + $0x10] sm:$0xff]
    %v114 = vld [vmem:[%s3 + $0x18] sm:$0xff]
    %v115 = vld [vmem:[%s3 + $0x20] sm:$0xff]
    %v116 = vld [vmem:[%s3 + $0x28] sm:$0xff]
    %v117 = vld [vmem:[%s3 + $0x30] sm:$0xff]
    %v118 = vld [vmem:[%s3 + $0x38] sm:$0xff]
    %v119 = vld [vmem:[%s3 + $0x40] sm:$0xff]
    %v120 = vld [vmem:[%s3 + $0x48] sm:$0xff]
    %v121 = vld [vmem:[%s3 + $0x50] sm:$0xff]
    %v122 = vld [vmem:[%s3 + $0x58] sm:$0xff]
    %v123 = vld [vmem:[%s3 + $0x60] sm:$0xff]
    %v124 = vld [vmem:[%s3 + $0x68] sm:$0xff]
    %v125 = vld [vmem:[%s3 + $0x70] sm:$0xff]
    %v126 = vld [vmem:[%s3 + $0x78] sm:$0xff]
    %v127 = vld [vmem:[%s4] sm:$0x3]
    %v129 = vperm.slane %v127, 0
    %v130 = vperm.slane %v127, 1
    %v149 = vunpack.c.l.b16 %v111
    %v150 = vunpack.c.h.b16 %v111
    %v151 = vunpack.c.l.b16 %v112
    %v152 = vunpack.c.h.b16 %v112
    %v153 = vunpack.c.l.b16 %v113
    %v154 = vunpack.c.h.b16 %v113
    %v155 = vunpack.c.l.b16 %v114
    %v156 = vunpack.c.h.b16 %v114
    %v157 = vunpack.c.l.b16 %v115
    %v158 = vunpack.c.h.b16 %v115
    %v159 = vunpack.c.l.b16 %v116
    %v160 = vunpack.c.h.b16 %v116
    %v161 = vunpack.c.l.b16 %v117
    %v162 = vunpack.c.h.b16 %v117
    %v163 = vunpack.c.l.b16 %v118
    %v164 = vunpack.c.h.b16 %v118
    %v165 = vunpack.c.l.b16 %v119
    %v166 = vunpack.c.h.b16 %v119
    %v167 = vunpack.c.l.b16 %v120
    %v168 = vunpack.c.h.b16 %v120
    %v169 = vunpack.c.l.b16 %v121
    %v170 = vunpack.c.h.b16 %v121
    %v171 = vunpack.c.l.b16 %v122
    %v172 = vunpack.c.h.b16 %v122
    %v173 = vunpack.c.l.b16 %v123
    %v174 = vunpack.c.h.b16 %v123
    %v175 = vunpack.c.l.b16 %v124
    %v176 = vunpack.c.h.b16 %v124
    %v177 = vunpack.c.l.b16 %v125
    %v178 = vunpack.c.h.b16 %v125
    %v179 = vunpack.c.l.b16 %v126
    %v180 = vunpack.c.h.b16 %v126
    %v181 = vpack.c.b16 %v151, %v149
    %v182 = vpack.c.b16 %v152, %v150
    %v183 = vpack.c.b16 %v155, %v153
    %v184 = vpack.c.b16 %v156, %v154
    %v185 = vpack.c.b16 %v159, %v157
    %v186 = vpack.c.b16 %v160, %v158
    %v187 = vpack.c.b16 %v163, %v161
    %v188 = vpack.c.b16 %v164, %v162
    %v189 = vpack.c.b16 %v167, %v165
    %v190 = vpack.c.b16 %v168, %v166
    %v191 = vpack.c.b16 %v171, %v169
    %v192 = vpack.c.b16 %v172, %v170
    %v193 = vpack.c.b16 %v175, %v173
    %v194 = vpack.c.b16 %v176, %v174
    %v195 = vpack.c.b16 %v179, %v177
    %v196 = vpack.c.b16 %v180, %v178
    %213 = vmatpush.bf16.msra.mxu0 %v195
    %214 = vmatpush.bf16.msra.mxu0 %v193
    %215 = vmatpush.bf16.msra.mxu0 %v191
    %216 = vmatpush.bf16.msra.mxu0 %v189
    %217 = vmatpush.bf16.msra.mxu0 %v187
    %218 = vmatpush.bf16.msra.mxu0 %v185
    %219 = vmatpush.bf16.msra.mxu0 %v183
    %220 = vmatpush.bf16.msra.mxu0 %v181
    %221 = vmatmul.bf16.gmra.mxu0 %v110
    %v222 = vpop.f32.mrf.mxu0
    %v223 = vadd.f32 %v129, %v222
    %v224 = vpop.f32.mrf.mxu0
    %225 = vdwg.mxu0
    %226 = vmatpush.bf16.msra.mxu0 %v196
    %227 = vmatpush.bf16.msra.mxu0 %v194
    %228 = vmatpush.bf16.msra.mxu0 %v192
    %229 = vmatpush.bf16.msra.mxu0 %v190
    %230 = vmatpush.bf16.msra.mxu0 %v188
    %231 = vmatpush.bf16.msra.mxu0 %v186
    %232 = vmatpush.bf16.msra.mxu0 %v184
    %233 = vmatpush.bf16.msra.mxu0 %v182
    %234 = vmatmul.bf16.gmra.mxu0 %v110
    %v235 = vpop.f32.mrf.mxu0
    %v236 = vadd.f32 %v130, %v235
    %v237 = vpop.f32.mrf.mxu0
    %238 = vdwg.mxu0
    %v239 = vmax.f32 %v223, 0.0
    %v240 = vmax.f32 %v236, 0.0
    %v241 = vpack.c.bf16 %v239, %v239
    %v242 = vpack.c.bf16 %v240, %v240
    %v243 = vld [vmem:[%s5] sm:$0xff]
    %v244 = vld [vmem:[%s5 + $0x8] sm:$0xff]
    %v245 = vld [vmem:[%s5 + $0x10] sm:$0xff]
    %v246 = vld [vmem:[%s5 + $0x18] sm:$0xf]
    %v247 = vld [vmem:[%s5 + $0x1c] sm:$0xff]
    %v248 = vld [vmem:[%s5 + $0x24] sm:$0xff]
    %v249 = vld [vmem:[%s5 + $0x2c] sm:$0xff]
    %v250 = vld [vmem:[%s5 + $0x34] sm:$0xf]
    %v251 = vld [vmem:[%s5 + $0x38] sm:$0xff]
    %v252 = vld [vmem:[%s5 + $0x40] sm:$0xff]
    %v253 = vld [vmem:[%s5 + $0x48] sm:$0xff]
    %v254 = vld [vmem:[%s5 + $0x50] sm:$0xf]
    %v255 = vld [vmem:[%s5 + $0x54] sm:$0xff]
    %v256 = vld [vmem:[%s5 + $0x5c] sm:$0xff]
    %v257 = vld [vmem:[%s5 + $0x64] sm:$0xff]
    %v258 = vld [vmem:[%s5 + $0x6c] sm:$0xf]
    %v259 = vld [vmem:[%s5 + $0x70] sm:$0xff]
    %v260 = vld [vmem:[%s5 + $0x78] sm:$0xff]
    %v261 = vld [vmem:[%s5 + $0x80] sm:$0xff]
    %v262 = vld [vmem:[%s5 + $0x88] sm:$0xf]
    %v263 = vld [vmem:[%s5 + $0x8c] sm:$0xff]
    %v264 = vld [vmem:[%s5 + $0x94] sm:$0xff]
    %v265 = vld [vmem:[%s5 + $0x9c] sm:$0xff]
    %v266 = vld [vmem:[%s5 + $0xa4] sm:$0xf]
    %v267 = vld [vmem:[%s5 + $0xa8] sm:$0xff]
    %v268 = vld [vmem:[%s5 + $0xb0] sm:$0xff]
    %v269 = vld [vmem:[%s5 + $0xb8] sm:$0xff]
    %v270 = vld [vmem:[%s5 + $0xc0] sm:$0xf]
    %v271 = vld [vmem:[%s5 + $0xc4] sm:$0xff]
    %v272 = vld [vmem:[%s5 + $0xcc] sm:$0xff]
    %v273 = vld [vmem:[%s5 + $0xd4] sm:$0xff]
    %v274 = vld [vmem:[%s5 + $0xdc] sm:$0xf]
    %v275 = vld [vmem:[%s5 + $0xe0] sm:$0xff]
    %v276 = vld [vmem:[%s5 + $0xe8] sm:$0xff]
    %v277 = vld [vmem:[%s5 + $0xf0] sm:$0xff]
    %v278 = vld [vmem:[%s5 + $0xf8] sm:$0xf]
    %v279 = vld [vmem:[%s5 + $0xfc] sm:$0xff]
    %v280 = vld [vmem:[%s5 + $0x104] sm:$0xff]
    %v281 = vld [vmem:[%s5 + $0x10c] sm:$0xff]
    %v282 = vld [vmem:[%s5 + $0x114] sm:$0xf]
    %v283 = vld [vmem:[%s5 + $0x118] sm:$0xff]
    %v284 = vld [vmem:[%s5 + $0x120] sm:$0xff]
    %v285 = vld [vmem:[%s5 + $0x128] sm:$0xff]
    %v286 = vld [vmem:[%s5 + $0x130] sm:$0xf]
    %v287 = vld [vmem:[%s5 + $0x134] sm:$0xff]
    %v288 = vld [vmem:[%s5 + $0x13c] sm:$0xff]
    %v289 = vld [vmem:[%s5 + $0x144] sm:$0xff]
    %v290 = vld [vmem:[%s5 + $0x14c] sm:$0xf]
    %v291 = vld [vmem:[%s5 + $0x150] sm:$0xff]
    %v292 = vld [vmem:[%s5 + $0x158] sm:$0xff]
    %v293 = vld [vmem:[%s5 + $0x160] sm:$0xff]
    %v294 = vld [vmem:[%s5 + $0x168] sm:$0xf]
    %v295 = vld [vmem:[%s5 + $0x16c] sm:$0xff]
    %v296 = vld [vmem:[%s5 + $0x174] sm:$0xff]
    %v297 = vld [vmem:[%s5 + $0x17c] sm:$0xff]
    %v298 = vld [vmem:[%s5 + $0x184] sm:$0xf]
    %v299 = vld [vmem:[%s5 + $0x188] sm:$0xff]
    %v300 = vld [vmem:[%s5 + $0x190] sm:$0xff]
    %v301 = vld [vmem:[%s5 + $0x198] sm:$0xff]
    %v302 = vld [vmem:[%s5 + $0x1a0] sm:$0xf]
    %v303 = vld [vmem:[%s5 + $0x1a4] sm:$0xff]
    %v304 = vld [vmem:[%s5 + $0x1ac] sm:$0xff]
    %v305 = vld [vmem:[%s5 + $0x1b4] sm:$0xff]
    %v306 = vld [vmem:[%s5 + $0x1bc] sm:$0xf]
    %v307 = vld [vmem:[%s5 + $0x1c0] sm:$0xff]
    %v308 = vld [vmem:[%s5 + $0x1c8] sm:$0xff]
    %v309 = vld [vmem:[%s5 + $0x1d0] sm:$0xff]
    %v310 = vld [vmem:[%s5 + $0x1d8] sm:$0xf]
    %v311 = vld [vmem:[%s5 + $0x1dc] sm:$0xff]
    %v312 = vld [vmem:[%s5 + $0x1e4] sm:$0xff]
    %v313 = vld [vmem:[%s5 + $0x1ec] sm:$0xff]
    %v314 = vld [vmem:[%s5 + $0x1f4] sm:$0xf]
    %v315 = vld [vmem:[%s5 + $0x1f8] sm:$0xff]
    %v316 = vld [vmem:[%s5 + $0x200] sm:$0xff]
    %v317 = vld [vmem:[%s5 + $0x208] sm:$0xff]
    %v318 = vld [vmem:[%s5 + $0x210] sm:$0xf]
    %v319 = vld [vmem:[%s5 + $0x214] sm:$0xff]
    %v320 = vld [vmem:[%s5 + $0x21c] sm:$0xff]
    %v321 = vld [vmem:[%s5 + $0x224] sm:$0xff]
    %v322 = vld [vmem:[%s5 + $0x22c] sm:$0xf]
    %v323 = vld [vmem:[%s5 + $0x230] sm:$0xff]
    %v324 = vld [vmem:[%s5 + $0x238] sm:$0xff]
    %v325 = vld [vmem:[%s5 + $0x240] sm:$0xff]
    %v326 = vld [vmem:[%s5 + $0x248] sm:$0xf]
    %v327 = vld [vmem:[%s5 + $0x24c] sm:$0xff]
    %v328 = vld [vmem:[%s5 + $0x254] sm:$0xff]
    %v329 = vld [vmem:[%s5 + $0x25c] sm:$0xff]
    %v330 = vld [vmem:[%s5 + $0x264] sm:$0xf]
    %v331 = vld [vmem:[%s5 + $0x268] sm:$0xff]
    %v332 = vld [vmem:[%s5 + $0x270] sm:$0xff]
    %v333 = vld [vmem:[%s5 + $0x278] sm:$0xff]
    %v334 = vld [vmem:[%s5 + $0x280] sm:$0xf]
    %v335 = vld [vmem:[%s5 + $0x284] sm:$0xff]
    %v336 = vld [vmem:[%s5 + $0x28c] sm:$0xff]
    %v337 = vld [vmem:[%s5 + $0x294] sm:$0xff]
    %v338 = vld [vmem:[%s5 + $0x29c] sm:$0xf]
    %v339 = vld [vmem:[%s5 + $0x2a0] sm:$0xff]
    %v340 = vld [vmem:[%s5 + $0x2a8] sm:$0xff]
    %v341 = vld [vmem:[%s5 + $0x2b0] sm:$0xff]
    %v342 = vld [vmem:[%s5 + $0x2b8] sm:$0xf]
    %v343 = vld [vmem:[%s5 + $0x2bc] sm:$0xff]
    %v344 = vld [vmem:[%s5 + $0x2c4] sm:$0xff]
    %v345 = vld [vmem:[%s5 + $0x2cc] sm:$0xff]
    %v346 = vld [vmem:[%s5 + $0x2d4] sm:$0xf]
    %v347 = vld [vmem:[%s5 + $0x2d8] sm:$0xff]
    %v348 = vld [vmem:[%s5 + $0x2e0] sm:$0xff]
    %v349 = vld [vmem:[%s5 + $0x2e8] sm:$0xff]
    %v350 = vld [vmem:[%s5 + $0x2f0] sm:$0xf]
    %v351 = vld [vmem:[%s5 + $0x2f4] sm:$0xff]
    %v352 = vld [vmem:[%s5 + $0x2fc] sm:$0xff]
    %v353 = vld [vmem:[%s5 + $0x304] sm:$0xff]
    %v354 = vld [vmem:[%s5 + $0x30c] sm:$0xf]
    %v355 = vld [vmem:[%s5 + $0x310] sm:$0xff]
    %v356 = vld [vmem:[%s5 + $0x318] sm:$0xff]
    %v357 = vld [vmem:[%s5 + $0x320] sm:$0xff]
    %v358 = vld [vmem:[%s5 + $0x328] sm:$0xf]
    %v359 = vld [vmem:[%s5 + $0x32c] sm:$0xff]
    %v360 = vld [vmem:[%s5 + $0x334] sm:$0xff]
    %v361 = vld [vmem:[%s5 + $0x33c] sm:$0xff]
    %v362 = vld [vmem:[%s5 + $0x344] sm:$0xf]
    %v363 = vld [vmem:[%s5 + $0x348] sm:$0xff]
    %v364 = vld [vmem:[%s5 + $0x350] sm:$0xff]
    %v365 = vld [vmem:[%s5 + $0x358] sm:$0xff]
    %v366 = vld [vmem:[%s5 + $0x360] sm:$0xf]
    %v367 = vld [vmem:[%s5 + $0x364] sm:$0xff]
    %v368 = vld [vmem:[%s5 + $0x36c] sm:$0xff]
    %v369 = vld [vmem:[%s5 + $0x374] sm:$0xff]
    %v370 = vld [vmem:[%s5 + $0x37c] sm:$0xf]
    %v371 = vld [vmem:[%s6] sm:$0x7f]
    %v373 = vperm.slane %v371, 0
    %v374 = vperm.slane %v371, 1
    %v375 = vperm.slane %v371, 2
    %v376 = vperm.slane %v371, 3
    %v377 = vperm.slane %v371, 4
    %v378 = vperm.slane %v371, 5
    %v379 = vperm.slane %v371, 6
    %v515 = vunpack.c.l.b16 %v243
    %v516 = vunpack.c.h.b16 %v243
    %v517 = vunpack.c.l.b16 %v244
    %v518 = vunpack.c.h.b16 %v244
    %v519 = vunpack.c.l.b16 %v245
    %v520 = vunpack.c.h.b16 %v245
    %v521 = vunpack.c.l.b16 %v246
    %v522 = vunpack.c.l.b16 %v247
    %v523 = vunpack.c.h.b16 %v247
    %v524 = vunpack.c.l.b16 %v248
    %v525 = vunpack.c.h.b16 %v248
    %v526 = vunpack.c.l.b16 %v249
    %v527 = vunpack.c.h.b16 %v249
    %v528 = vunpack.c.l.b16 %v250
    %v529 = vunpack.c.l.b16 %v251
    %v530 = vunpack.c.h.b16 %v251
    %v531 = vunpack.c.l.b16 %v252
    %v532 = vunpack.c.h.b16 %v252
    %v533 = vunpack.c.l.b16 %v253
    %v534 = vunpack.c.h.b16 %v253
    %v535 = vunpack.c.l.b16 %v254
    %v536 = vunpack.c.l.b16 %v255
    %v537 = vunpack.c.h.b16 %v255
    %v538 = vunpack.c.l.b16 %v256
    %v539 = vunpack.c.h.b16 %v256
    %v540 = vunpack.c.l.b16 %v257
    %v541 = vunpack.c.h.b16 %v257
    %v542 = vunpack.c.l.b16 %v258
    %v543 = vunpack.c.l.b16 %v259
    %v544 = vunpack.c.h.b16 %v259
    %v545 = vunpack.c.l.b16 %v260
    %v546 = vunpack.c.h.b16 %v260
    %v547 = vunpack.c.l.b16 %v261
    %v548 = vunpack.c.h.b16 %v261
    %v549 = vunpack.c.l.b16 %v262
    %v550 = vunpack.c.l.b16 %v263
    %v551 = vunpack.c.h.b16 %v263
    %v552 = vunpack.c.l.b16 %v264
    %v553 = vunpack.c.h.b16 %v264
    %v554 = vunpack.c.l.b16 %v265
    %v555 = vunpack.c.h.b16 %v265
    %v556 = vunpack.c.l.b16 %v266
    %v557 = vunpack.c.l.b16 %v267
    %v558 = vunpack.c.h.b16 %v267
    %v559 = vunpack.c.l.b16 %v268
    %v560 = vunpack.c.h.b16 %v268
    %v561 = vunpack.c.l.b16 %v269
    %v562 = vunpack.c.h.b16 %v269
    %v563 = vunpack.c.l.b16 %v270
    %v564 = vunpack.c.l.b16 %v271
    %v565 = vunpack.c.h.b16 %v271
    %v566 = vunpack.c.l.b16 %v272
    %v567 = vunpack.c.h.b16 %v272
    %v568 = vunpack.c.l.b16 %v273
    %v569 = vunpack.c.h.b16 %v273
    %v570 = vunpack.c.l.b16 %v274
    %v571 = vunpack.c.l.b16 %v275
    %v572 = vunpack.c.h.b16 %v275
    %v573 = vunpack.c.l.b16 %v276
    %v574 = vunpack.c.h.b16 %v276
    %v575 = vunpack.c.l.b16 %v277
    %v576 = vunpack.c.h.b16 %v277
    %v577 = vunpack.c.l.b16 %v278
    %v578 = vunpack.c.l.b16 %v279
    %v579 = vunpack.c.h.b16 %v279
    %v580 = vunpack.c.l.b16 %v280
    %v581 = vunpack.c.h.b16 %v280
    %v582 = vunpack.c.l.b16 %v281
    %v583 = vunpack.c.h.b16 %v281
    %v584 = vunpack.c.l.b16 %v282
    %v585 = vunpack.c.l.b16 %v283
    %v586 = vunpack.c.h.b16 %v283
    %v587 = vunpack.c.l.b16 %v284
    %v588 = vunpack.c.h.b16 %v284
    %v589 = vunpack.c.l.b16 %v285
    %v590 = vunpack.c.h.b16 %v285
    %v591 = vunpack.c.l.b16 %v286
    %v592 = vunpack.c.l.b16 %v287
    %v593 = vunpack.c.h.b16 %v287
    %v594 = vunpack.c.l.b16 %v288
    %v595 = vunpack.c.h.b16 %v288
    %v596 = vunpack.c.l.b16 %v289
    %v597 = vunpack.c.h.b16 %v289
    %v598 = vunpack.c.l.b16 %v290
    %v599 = vunpack.c.l.b16 %v291
    %v600 = vunpack.c.h.b16 %v291
    %v601 = vunpack.c.l.b16 %v292
    %v602 = vunpack.c.h.b16 %v292
    %v603 = vunpack.c.l.b16 %v293
    %v604 = vunpack.c.h.b16 %v293
    %v605 = vunpack.c.l.b16 %v294
    %v606 = vunpack.c.l.b16 %v295
    %v607 = vunpack.c.h.b16 %v295
    %v608 = vunpack.c.l.b16 %v296
    %v609 = vunpack.c.h.b16 %v296
    %v610 = vunpack.c.l.b16 %v297
    %v611 = vunpack.c.h.b16 %v297
    %v612 = vunpack.c.l.b16 %v298
    %v613 = vunpack.c.l.b16 %v299
    %v614 = vunpack.c.h.b16 %v299
    %v615 = vunpack.c.l.b16 %v300
    %v616 = vunpack.c.h.b16 %v300
    %v617 = vunpack.c.l.b16 %v301
    %v618 = vunpack.c.h.b16 %v301
    %v619 = vunpack.c.l.b16 %v302
    %v620 = vunpack.c.l.b16 %v303
    %v621 = vunpack.c.h.b16 %v303
    %v622 = vunpack.c.l.b16 %v304
    %v623 = vunpack.c.h.b16 %v304
    %v624 = vunpack.c.l.b16 %v305
    %v625 = vunpack.c.h.b16 %v305
    %v626 = vunpack.c.l.b16 %v306
    %v627 = vunpack.c.l.b16 %v307
    %v628 = vunpack.c.h.b16 %v307
    %v629 = vunpack.c.l.b16 %v308
    %v630 = vunpack.c.h.b16 %v308
    %v631 = vunpack.c.l.b16 %v309
    %v632 = vunpack.c.h.b16 %v309
    %v633 = vunpack.c.l.b16 %v310
    %v634 = vunpack.c.l.b16 %v311
    %v635 = vunpack.c.h.b16 %v311
    %v636 = vunpack.c.l.b16 %v312
    %v637 = vunpack.c.h.b16 %v312
    %v638 = vunpack.c.l.b16 %v313
    %v639 = vunpack.c.h.b16 %v313
    %v640 = vunpack.c.l.b16 %v314
    %v641 = vunpack.c.l.b16 %v315
    %v642 = vunpack.c.h.b16 %v315
    %v643 = vunpack.c.l.b16 %v316
    %v644 = vunpack.c.h.b16 %v316
    %v645 = vunpack.c.l.b16 %v317
    %v646 = vunpack.c.h.b16 %v317
    %v647 = vunpack.c.l.b16 %v318
    %v648 = vunpack.c.l.b16 %v319
    %v649 = vunpack.c.h.b16 %v319
    %v650 = vunpack.c.l.b16 %v320
    %v651 = vunpack.c.h.b16 %v320
    %v652 = vunpack.c.l.b16 %v321
    %v653 = vunpack.c.h.b16 %v321
    %v654 = vunpack.c.l.b16 %v322
    %v655 = vunpack.c.l.b16 %v323
    %v656 = vunpack.c.h.b16 %v323
    %v657 = vunpack.c.l.b16 %v324
    %v658 = vunpack.c.h.b16 %v324
    %v659 = vunpack.c.l.b16 %v325
    %v660 = vunpack.c.h.b16 %v325
    %v661 = vunpack.c.l.b16 %v326
    %v662 = vunpack.c.l.b16 %v327
    %v663 = vunpack.c.h.b16 %v327
    %v664 = vunpack.c.l.b16 %v328
    %v665 = vunpack.c.h.b16 %v328
    %v666 = vunpack.c.l.b16 %v329
    %v667 = vunpack.c.h.b16 %v329
    %v668 = vunpack.c.l.b16 %v330
    %v669 = vunpack.c.l.b16 %v331
    %v670 = vunpack.c.h.b16 %v331
    %v671 = vunpack.c.l.b16 %v332
    %v672 = vunpack.c.h.b16 %v332
    %v673 = vunpack.c.l.b16 %v333
    %v674 = vunpack.c.h.b16 %v333
    %v675 = vunpack.c.l.b16 %v334
    %v676 = vunpack.c.l.b16 %v335
    %v677 = vunpack.c.h.b16 %v335
    %v678 = vunpack.c.l.b16 %v336
    %v679 = vunpack.c.h.b16 %v336
    %v680 = vunpack.c.l.b16 %v337
    %v681 = vunpack.c.h.b16 %v337
    %v682 = vunpack.c.l.b16 %v338
    %v683 = vunpack.c.l.b16 %v339
    %v684 = vunpack.c.h.b16 %v339
    %v685 = vunpack.c.l.b16 %v340
    %v686 = vunpack.c.h.b16 %v340
    %v687 = vunpack.c.l.b16 %v341
    %v688 = vunpack.c.h.b16 %v341
    %v689 = vunpack.c.l.b16 %v342
    %v690 = vunpack.c.l.b16 %v343
    %v691 = vunpack.c.h.b16 %v343
    %v692 = vunpack.c.l.b16 %v344
    %v693 = vunpack.c.h.b16 %v344
    %v694 = vunpack.c.l.b16 %v345
    %v695 = vunpack.c.h.b16 %v345
    %v696 = vunpack.c.l.b16 %v346
    %v697 = vunpack.c.l.b16 %v347
    %v698 = vunpack.c.h.b16 %v347
    %v699 = vunpack.c.l.b16 %v348
    %v700 = vunpack.c.h.b16 %v348
    %v701 = vunpack.c.l.b16 %v349
    %v702 = vunpack.c.h.b16 %v349
    %v703 = vunpack.c.l.b16 %v350
    %v704 = vunpack.c.l.b16 %v351
    %v705 = vunpack.c.h.b16 %v351
    %v706 = vunpack.c.l.b16 %v352
    %v707 = vunpack.c.h.b16 %v352
    %v708 = vunpack.c.l.b16 %v353
    %v709 = vunpack.c.h.b16 %v353
    %v710 = vunpack.c.l.b16 %v354
    %v711 = vunpack.c.l.b16 %v355
    %v712 = vunpack.c.h.b16 %v355
    %v713 = vunpack.c.l.b16 %v356
    %v714 = vunpack.c.h.b16 %v356
    %v715 = vunpack.c.l.b16 %v357
    %v716 = vunpack.c.h.b16 %v357
    %v717 = vunpack.c.l.b16 %v358
    %v718 = vunpack.c.l.b16 %v359
    %v719 = vunpack.c.h.b16 %v359
    %v720 = vunpack.c.l.b16 %v360
    %v721 = vunpack.c.h.b16 %v360
    %v722 = vunpack.c.l.b16 %v361
    %v723 = vunpack.c.h.b16 %v361
    %v724 = vunpack.c.l.b16 %v362
    %v725 = vunpack.c.l.b16 %v363
    %v726 = vunpack.c.h.b16 %v363
    %v727 = vunpack.c.l.b16 %v364
    %v728 = vunpack.c.h.b16 %v364
    %v729 = vunpack.c.l.b16 %v365
    %v730 = vunpack.c.h.b16 %v365
    %v731 = vunpack.c.l.b16 %v366
    %v732 = vunpack.c.l.b16 %v367
    %v733 = vunpack.c.h.b16 %v367
    %v734 = vunpack.c.l.b16 %v368
    %v735 = vunpack.c.h.b16 %v368
    %v736 = vunpack.c.l.b16 %v369
    %v737 = vunpack.c.h.b16 %v369
    %v738 = vunpack.c.l.b16 %v370
    %v739 = vpack.c.b16 %v522, %v515
    %v740 = vpack.c.b16 %v523, %v516
    %v741 = vpack.c.b16 %v524, %v517
    %v742 = vpack.c.b16 %v525, %v518
    %v743 = vpack.c.b16 %v526, %v519
    %v744 = vpack.c.b16 %v527, %v520
    %v745 = vpack.c.b16 %v528, %v521
    %v746 = vpack.c.b16 %v536, %v529
    %v747 = vpack.c.b16 %v537, %v530
    %v748 = vpack.c.b16 %v538, %v531
    %v749 = vpack.c.b16 %v539, %v532
    %v750 = vpack.c.b16 %v540, %v533
    %v751 = vpack.c.b16 %v541, %v534
    %v752 = vpack.c.b16 %v542, %v535
    %v753 = vpack.c.b16 %v550, %v543
    %v754 = vpack.c.b16 %v551, %v544
    %v755 = vpack.c.b16 %v552, %v545
    %v756 = vpack.c.b16 %v553, %v546
    %v757 = vpack.c.b16 %v554, %v547
    %v758 = vpack.c.b16 %v555, %v548
    %v759 = vpack.c.b16 %v556, %v549
    %v760 = vpack.c.b16 %v564, %v557
    %v761 = vpack.c.b16 %v565, %v558
    %v762 = vpack.c.b16 %v566, %v559
    %v763 = vpack.c.b16 %v567, %v560
    %v764 = vpack.c.b16 %v568, %v561
    %v765 = vpack.c.b16 %v569, %v562
    %v766 = vpack.c.b16 %v570, %v563
    %v767 = vpack.c.b16 %v578, %v571
    %v768 = vpack.c.b16 %v579, %v572
    %v769 = vpack.c.b16 %v580, %v573
    %v770 = vpack.c.b16 %v581, %v574
    %v771 = vpack.c.b16 %v582, %v575
    %v772 = vpack.c.b16 %v583, %v576
    %v773 = vpack.c.b16 %v584, %v577
    %v774 = vpack.c.b16 %v592, %v585
    %v775 = vpack.c.b16 %v593, %v586
    %v776 = vpack.c.b16 %v594, %v587
    %v777 = vpack.c.b16 %v595, %v588
    %v778 = vpack.c.b16 %v596, %v589
    %v779 = vpack.c.b16 %v597, %v590
    %v780 = vpack.c.b16 %v598, %v591
    %v781 = vpack.c.b16 %v606, %v599
    %v782 = vpack.c.b16 %v607, %v600
    %v783 = vpack.c.b16 %v608, %v601
    %v784 = vpack.c.b16 %v609, %v602
    %v785 = vpack.c.b16 %v610, %v603
    %v786 = vpack.c.b16 %v611, %v604
    %v787 = vpack.c.b16 %v612, %v605
    %v788 = vpack.c.b16 %v620, %v613
    %v789 = vpack.c.b16 %v621, %v614
    %v790 = vpack.c.b16 %v622, %v615
    %v791 = vpack.c.b16 %v623, %v616
    %v792 = vpack.c.b16 %v624, %v617
    %v793 = vpack.c.b16 %v625, %v618
    %v794 = vpack.c.b16 %v626, %v619
    %v795 = vpack.c.b16 %v634, %v627
    %v796 = vpack.c.b16 %v635, %v628
    %v797 = vpack.c.b16 %v636, %v629
    %v798 = vpack.c.b16 %v637, %v630
    %v799 = vpack.c.b16 %v638, %v631
    %v800 = vpack.c.b16 %v639, %v632
    %v801 = vpack.c.b16 %v640, %v633
    %v802 = vpack.c.b16 %v648, %v641
    %v803 = vpack.c.b16 %v649, %v642
    %v804 = vpack.c.b16 %v650, %v643
    %v805 = vpack.c.b16 %v651, %v644
    %v806 = vpack.c.b16 %v652, %v645
    %v807 = vpack.c.b16 %v653, %v646
    %v808 = vpack.c.b16 %v654, %v647
    %v809 = vpack.c.b16 %v662, %v655
    %v810 = vpack.c.b16 %v663, %v656
    %v811 = vpack.c.b16 %v664, %v657
    %v812 = vpack.c.b16 %v665, %v658
    %v813 = vpack.c.b16 %v666, %v659
    %v814 = vpack.c.b16 %v667, %v660
    %v815 = vpack.c.b16 %v668, %v661
    %v816 = vpack.c.b16 %v676, %v669
    %v817 = vpack.c.b16 %v677, %v670
    %v818 = vpack.c.b16 %v678, %v671
    %v819 = vpack.c.b16 %v679, %v672
    %v820 = vpack.c.b16 %v680, %v673
    %v821 = vpack.c.b16 %v681, %v674
    %v822 = vpack.c.b16 %v682, %v675
    %v823 = vpack.c.b16 %v690, %v683
    %v824 = vpack.c.b16 %v691, %v684
    %v825 = vpack.c.b16 %v692, %v685
    %v826 = vpack.c.b16 %v693, %v686
    %v827 = vpack.c.b16 %v694, %v687
    %v828 = vpack.c.b16 %v695, %v688
    %v829 = vpack.c.b16 %v696, %v689
    %v830 = vpack.c.b16 %v704, %v697
    %v831 = vpack.c.b16 %v705, %v698
    %v832 = vpack.c.b16 %v706, %v699
    %v833 = vpack.c.b16 %v707, %v700
    %v834 = vpack.c.b16 %v708, %v701
    %v835 = vpack.c.b16 %v709, %v702
    %v836 = vpack.c.b16 %v710, %v703
    %v837 = vpack.c.b16 %v718, %v711
    %v838 = vpack.c.b16 %v719, %v712
    %v839 = vpack.c.b16 %v720, %v713
    %v840 = vpack.c.b16 %v721, %v714
    %v841 = vpack.c.b16 %v722, %v715
    %v842 = vpack.c.b16 %v723, %v716
    %v843 = vpack.c.b16 %v724, %v717
    %v844 = vpack.c.b16 %v732, %v725
    %v845 = vpack.c.b16 %v733, %v726
    %v846 = vpack.c.b16 %v734, %v727
    %v847 = vpack.c.b16 %v735, %v728
    %v848 = vpack.c.b16 %v736, %v729
    %v849 = vpack.c.b16 %v737, %v730
    %v850 = vpack.c.b16 %v738, %v731
    %963 = vmatpush.bf16.msra.mxu0 %v788
    %964 = vmatpush.bf16.msra.mxu0 %v781
    %965 = vmatpush.bf16.msra.mxu0 %v774
    %966 = vmatpush.bf16.msra.mxu0 %v767
    %967 = vmatpush.bf16.msra.mxu0 %v760
    %968 = vmatpush.bf16.msra.mxu0 %v753
    %969 = vmatpush.bf16.msra.mxu0 %v746
    %970 = vmatpush.bf16.msra.mxu0 %v739
    %971 = vmatmul.bf16.gmra.mxu0 %v241
    %v972 = vpop.f32.mrf.mxu0
    %v973 = vadd.f32 %v373, %v972
    %v974 = vpop.f32.mrf.mxu0
    %975 = vdwg.mxu0
    %976 = vmatpush.bf16.msra.mxu0 %v844
    %977 = vmatpush.bf16.msra.mxu0 %v837
    %978 = vmatpush.bf16.msra.mxu0 %v830
    %979 = vmatpush.bf16.msra.mxu0 %v823
    %980 = vmatpush.bf16.msra.mxu0 %v816
    %981 = vmatpush.bf16.msra.mxu0 %v809
    %982 = vmatpush.bf16.msra.mxu0 %v802
    %983 = vmatpush.bf16.msra.mxu0 %v795
    %984 = vmatmul.bf16.gmra.mxu0 %v242
    %v985 = vpop.f32.mrf.mxu0
    %v986 = vadd.f32 %v973, %v985
    %v987 = vpop.f32.mrf.mxu0
    %988 = vdwg.mxu0
    %989 = vmatpush.bf16.msra.mxu0 %v789
    %990 = vmatpush.bf16.msra.mxu0 %v782
    %991 = vmatpush.bf16.msra.mxu0 %v775
    %992 = vmatpush.bf16.msra.mxu0 %v768
    %993 = vmatpush.bf16.msra.mxu0 %v761
    %994 = vmatpush.bf16.msra.mxu0 %v754
    %995 = vmatpush.bf16.msra.mxu0 %v747
    %996 = vmatpush.bf16.msra.mxu0 %v740
    %997 = vmatmul.bf16.gmra.mxu0 %v241
    %v998 = vpop.f32.mrf.mxu0
    %v999 = vadd.f32 %v374, %v998
    %v1000 = vpop.f32.mrf.mxu0
    %1001 = vdwg.mxu0
    %1002 = vmatpush.bf16.msra.mxu0 %v845
    %1003 = vmatpush.bf16.msra.mxu0 %v838
    %1004 = vmatpush.bf16.msra.mxu0 %v831
    %1005 = vmatpush.bf16.msra.mxu0 %v824
    %1006 = vmatpush.bf16.msra.mxu0 %v817
    %1007 = vmatpush.bf16.msra.mxu0 %v810
    %1008 = vmatpush.bf16.msra.mxu0 %v803
    %1009 = vmatpush.bf16.msra.mxu0 %v796
    %1010 = vmatmul.bf16.gmra.mxu0 %v242
    %v1011 = vpop.f32.mrf.mxu0
    %v1012 = vadd.f32 %v999, %v1011
    %v1013 = vpop.f32.mrf.mxu0
    %1014 = vdwg.mxu0
    %1015 = vmatpush.bf16.msra.mxu0 %v790
    %1016 = vmatpush.bf16.msra.mxu0 %v783
    %1017 = vmatpush.bf16.msra.mxu0 %v776
    %1018 = vmatpush.bf16.msra.mxu0 %v769
    %1019 = vmatpush.bf16.msra.mxu0 %v762
    %1020 = vmatpush.bf16.msra.mxu0 %v755
    %1021 = vmatpush.bf16.msra.mxu0 %v748
    %1022 = vmatpush.bf16.msra.mxu0 %v741
    %1023 = vmatmul.bf16.gmra.mxu0 %v241
    %v1024 = vpop.f32.mrf.mxu0
    %v1025 = vadd.f32 %v375, %v1024
    %v1026 = vpop.f32.mrf.mxu0
    %1027 = vdwg.mxu0
    %1028 = vmatpush.bf16.msra.mxu0 %v846
    %1029 = vmatpush.bf16.msra.mxu0 %v839
    %1030 = vmatpush.bf16.msra.mxu0 %v832
    %1031 = vmatpush.bf16.msra.mxu0 %v825
    %1032 = vmatpush.bf16.msra.mxu0 %v818
    %1033 = vmatpush.bf16.msra.mxu0 %v811
    %1034 = vmatpush.bf16.msra.mxu0 %v804
    %1035 = vmatpush.bf16.msra.mxu0 %v797
    %1036 = vmatmul.bf16.gmra.mxu0 %v242
    %v1037 = vpop.f32.mrf.mxu0
    %v1038 = vadd.f32 %v1025, %v1037
    %v1039 = vpop.f32.mrf.mxu0
    %1040 = vdwg.mxu0
    %1041 = vmatpush.bf16.msra.mxu0 %v791
    %1042 = vmatpush.bf16.msra.mxu0 %v784
    %1043 = vmatpush.bf16.msra.mxu0 %v777
    %1044 = vmatpush.bf16.msra.mxu0 %v770
    %1045 = vmatpush.bf16.msra.mxu0 %v763
    %1046 = vmatpush.bf16.msra.mxu0 %v756
    %1047 = vmatpush.bf16.msra.mxu0 %v749
    %1048 = vmatpush.bf16.msra.mxu0 %v742
    %1049 = vmatmul.bf16.gmra.mxu0 %v241
    %v1050 = vpop.f32.mrf.mxu0
    %v1051 = vadd.f32 %v376, %v1050
    %v1052 = vpop.f32.mrf.mxu0
    %1053 = vdwg.mxu0
    %1054 = vmatpush.bf16.msra.mxu0 %v847
    %1055 = vmatpush.bf16.msra.mxu0 %v840
    %1056 = vmatpush.bf16.msra.mxu0 %v833
    %1057 = vmatpush.bf16.msra.mxu0 %v826
    %1058 = vmatpush.bf16.msra.mxu0 %v819
    %1059 = vmatpush.bf16.msra.mxu0 %v812
    %1060 = vmatpush.bf16.msra.mxu0 %v805
    %1061 = vmatpush.bf16.msra.mxu0 %v798
    %1062 = vmatmul.bf16.gmra.mxu0 %v242
    %v1063 = vpop.f32.mrf.mxu0
    %v1064 = vadd.f32 %v1051, %v1063
    %v1065 = vpop.f32.mrf.mxu0
    %1066 = vdwg.mxu0
    %1067 = vmatpush.bf16.msra.mxu0 %v792
    %1068 = vmatpush.bf16.msra.mxu0 %v785
    %1069 = vmatpush.bf16.msra.mxu0 %v778
    %1070 = vmatpush.bf16.msra.mxu0 %v771
    %1071 = vmatpush.bf16.msra.mxu0 %v764
    %1072 = vmatpush.bf16.msra.mxu0 %v757
    %1073 = vmatpush.bf16.msra.mxu0 %v750
    %1074 = vmatpush.bf16.msra.mxu0 %v743
    %1075 = vmatmul.bf16.gmra.mxu0 %v241
    %v1076 = vpop.f32.mrf.mxu0
    %v1077 = vadd.f32 %v377, %v1076
    %v1078 = vpop.f32.mrf.mxu0
    %1079 = vdwg.mxu0
    %1080 = vmatpush.bf16.msra.mxu0 %v848
    %1081 = vmatpush.bf16.msra.mxu0 %v841
    %1082 = vmatpush.bf16.msra.mxu0 %v834
    %1083 = vmatpush.bf16.msra.mxu0 %v827
    %1084 = vmatpush.bf16.msra.mxu0 %v820
    %1085 = vmatpush.bf16.msra.mxu0 %v813
    %1086 = vmatpush.bf16.msra.mxu0 %v806
    %1087 = vmatpush.bf16.msra.mxu0 %v799
    %1088 = vmatmul.bf16.gmra.mxu0 %v242
    %v1089 = vpop.f32.mrf.mxu0
    %v1090 = vadd.f32 %v1077, %v1089
    %v1091 = vpop.f32.mrf.mxu0
    %1092 = vdwg.mxu0
    %1093 = vmatpush.bf16.msra.mxu0 %v793
    %1094 = vmatpush.bf16.msra.mxu0 %v786
    %1095 = vmatpush.bf16.msra.mxu0 %v779
    %1096 = vmatpush.bf16.msra.mxu0 %v772
    %1097 = vmatpush.bf16.msra.mxu0 %v765
    %1098 = vmatpush.bf16.msra.mxu0 %v758
    %1099 = vmatpush.bf16.msra.mxu0 %v751
    %1100 = vmatpush.bf16.msra.mxu0 %v744
    %1101 = vmatmul.bf16.gmra.mxu0 %v241
    %v1102 = vpop.f32.mrf.mxu0
    %v1103 = vadd.f32 %v378, %v1102
    %v1104 = vpop.f32.mrf.mxu0
    %1105 = vdwg.mxu0
    %1106 = vmatpush.bf16.msra.mxu0 %v849
    %1107 = vmatpush.bf16.msra.mxu0 %v842
    %1108 = vmatpush.bf16.msra.mxu0 %v835
    %1109 = vmatpush.bf16.msra.mxu0 %v828
    %1110 = vmatpush.bf16.msra.mxu0 %v821
    %1111 = vmatpush.bf16.msra.mxu0 %v814
    %1112 = vmatpush.bf16.msra.mxu0 %v807
    %1113 = vmatpush.bf16.msra.mxu0 %v800
    %1114 = vmatmul.bf16.gmra.mxu0 %v242
    %v1115 = vpop.f32.mrf.mxu0
    %v1116 = vadd.f32 %v1103, %v1115
    %v1117 = vpop.f32.mrf.mxu0
    %1118 = vdwg.mxu0
    %1119 = vmatpush.bf16.msra.mxu0 %v794
    %1120 = vmatpush.bf16.msra.mxu0 %v787
    %1121 = vmatpush.bf16.msra.mxu0 %v780
    %1122 = vmatpush.bf16.msra.mxu0 %v773
    %1123 = vmatpush.bf16.msra.mxu0 %v766
    %1124 = vmatpush.bf16.msra.mxu0 %v759
    %1125 = vmatpush.bf16.msra.mxu0 %v752
    %1126 = vmatpush.bf16.msra.mxu0 %v745
    %1127 = vmatmul.bf16.gmra.mxu0 %v241
    %v1128 = vpop.f32.mrf.mxu0
    %v1129 = vadd.f32 %v379, %v1128
    %v1130 = vpop.f32.mrf.mxu0
    %1131 = vdwg.mxu0
    %1132 = vmatpush.bf16.msra.mxu0 %v850
    %1133 = vmatpush.bf16.msra.mxu0 %v843
    %1134 = vmatpush.bf16.msra.mxu0 %v836
    %1135 = vmatpush.bf16.msra.mxu0 %v829
    %1136 = vmatpush.bf16.msra.mxu0 %v822
    %1137 = vmatpush.bf16.msra.mxu0 %v815
    %1138 = vmatpush.bf16.msra.mxu0 %v808
    %1139 = vmatpush.bf16.msra.mxu0 %v801
    %1140 = vmatmul.bf16.gmra.mxu0 %v242
    %v1141 = vpop.f32.mrf.mxu0
    %v1142 = vadd.f32 %v1129, %v1141
    %v1143 = vpop.f32.mrf.mxu0
    %1144 = vdwg.mxu0
    %v1145 = vmul.f32 %v986, 0.5
    %v1146 = vmul.f32 %v1012, 0.5
    %v1147 = vmul.f32 %v1038, 0.5
    %v1148 = vmul.f32 %v1064, 0.5
    %v1149 = vmul.f32 %v1090, 0.5
    %v1150 = vmul.f32 %v1116, 0.5
    %v1151 = vmul.f32 %v1142, 0.5
    %v1152 = vtanh.pop %v1145
    %v1153 = vtanh.pop %v1146
    %v1154 = vtanh.pop %v1147
    %v1155 = vtanh.pop %v1148
    %v1156 = vtanh.pop %v1149
    %v1157 = vtanh.pop %v1150
    %v1158 = vtanh.pop %v1151
    %v1159 = vadd.f32 %v1152, 1.0
    %v1160 = vadd.f32 %v1153, 1.0
    %v1161 = vadd.f32 %v1154, 1.0
    %v1162 = vadd.f32 %v1155, 1.0
    %v1163 = vadd.f32 %v1156, 1.0
    %v1164 = vadd.f32 %v1157, 1.0
    %v1165 = vadd.f32 %v1158, 1.0
    %v1166 = vmul.f32 %v1159, 0.5
    %v1167 = vmul.f32 %v1160, 0.5
    %v1168 = vmul.f32 %v1161, 0.5
    %v1169 = vmul.f32 %v1162, 0.5
    %v1170 = vmul.f32 %v1163, 0.5
    %v1171 = vmul.f32 %v1164, 0.5
    %v1172 = vmul.f32 %v1165, 0.5
    %v1173 = vpack.c.bf16 %v1167, %v1166
    %v1174 = vpack.c.bf16 %v1169, %v1168
    %v1175 = vpack.c.bf16 %v1171, %v1170
    %v1176 = vpack.c.bf16 %v1172, %v1172
    %1177 = vst [vmem:[#allocation2] sm:$0xff] %v1173
    %1178 = vst [vmem:[#allocation2 + $0x8] sm:$0xff] %v1174
    %1179 = vst [vmem:[#allocation2 + $0x10] sm:$0xff] %v1175
    %vm1180 = vcmask 125952
    %1181 = vst.msk [vmem:[#allocation2 + $0x18] sm:$0xf] %vm1180, %v1176
    // Predicated region
    $region30: #{tpu_custom_call.1} parent=1 // pred_check
      _
    $region31: #{tpu_custom_call.1} parent=1 // pred_check_branch
      %1183 = sbr.rel (0) target = $region33
    $region32: #{tpu_custom_call.1} parent=1 // pred_region
      %1185 = vsyncadd [#allocation3], 0
      %s1187 = sshll.u32 [#allocation2], 4
      %s1188 = int_to_ptr.vmem [resolvable:$true] %s1187
      %s1189 = sshll.u32 %s7, 4
      %s1190 = int_to_ptr.hbm [resolvable:$true] %s1189
      %1192 = dma.vmem_to_hbm [thread:$0]  %s1188, 448, %s1190, [#allocation3]
    $region33: #{tpu_custom_call.1} parent=1 // pred_fallthru
      _
    // Predicated region
    $region34: #{tpu_custom_call.1} parent=1 // pred_check
      _
    $region35: #{tpu_custom_call.1} parent=1 // pred_check_branch
      %1194 = sbr.rel (0) target = $region37
    $region36: #{tpu_custom_call.1} parent=1 // pred_region
      %1196 = dma.done [#allocation3], 448
    $region37: #{tpu_custom_call.1} parent=1 // pred_fallthru
      _
    %1197 = vsyncpa [#allocation3], 1

</llo_original>
